<compile_context>
chip_gen: v6e
topology: v6e:2x2x1
jax: 0.10.0
libtpu: 0.0.40
codegen_flags: <defaults>
</compile_context>

<pallas_src>
import math

import jax
import jax.numpy as jnp
from jax.experimental import pallas as pl
from jax.experimental.pallas import tpu as pltpu

DIM = 456          # nn.Linear in_features  (default dim=456)
NUM_CLASSES = 10   # nn.Linear out_features (default num_classes=10)


def _round_up(x, m):
    return ((x + m - 1) // m) * m


# --------------------------- Pallas kernel ----------------------------------

def _linear_bias_kernel(z_ref, w_ref, b_ref, o_ref):
    # One MXU matmul with fused bias add; f32 accumulation.
    o_ref[...] = (jnp.dot(z_ref[...], w_ref[...],
                          preferred_element_type=jnp.float32)
                  + b_ref[...]).astype(o_ref.dtype)


def linear_pallas(z, w_t, b2, *, row_block=1024):
    """out = z @ w_t + b2, matching torch.nn.Linear (weight pre-transposed).

    z:   (M, K) activations
    w_t: (K, N) weight, already transposed from torch (N, K) layout
    b2:  (1, N) bias
    """
    M, K = z.shape
    N = w_t.shape[1]

    if M <= row_block:
        # Single block covering the whole problem: one grid step, no padding,
        # no slicing — minimal launch / pipeline overhead for small batches.
        tm = M
    else:
        # Keep at least ~4 grid steps so dimension_semantics=("parallel",)
        # can shard rows across both TensorCores on v7x; tm stays a multiple
        # of 8 to satisfy the sublane constraint.
        tm = min(row_block, max(_round_up(pl.cdiv(M, 4), 8), 8))

    grid = (pl.cdiv(M, tm),)

    cost = pl.CostEstimate(
        flops=2 * M * K * N,
        transcendentals=0,
        bytes_accessed=4 * (M * K + K * N + M * N),
    )

    out = pl.pallas_call(
        _linear_bias_kernel,
        out_shape=jax.ShapeDtypeStruct((M, N), jnp.float32),
        grid_spec=pltpu.PrefetchScalarGridSpec(
            num_scalar_prefetch=0,
            grid=grid,
            in_specs=[
                pl.BlockSpec((tm, K), lambda i: (i, 0)),   # full K per step
                pl.BlockSpec((K, N), lambda i: (0, 0)),    # weight resident
                pl.BlockSpec((1, N), lambda i: (0, 0)),    # bias resident
            ],
            out_specs=pl.BlockSpec((tm, N), lambda i: (i, 0))),
        compiler_params=pltpu.CompilerParams(
            # Rows are independent -> shard the (only) grid axis across
            # TensorCores on v7x; harmless on v5e/v6e.
            dimension_semantics=("parallel",)),
        cost_estimate=cost,
    )(z, w_t, b2)
    return out


# --------------------------- model assembly ---------------------------------

def densenet_classifier_forward(z, params):
    w_t, b2 = params
    return linear_pallas(z, w_t, b2)


def init_params(key, dim=DIM, num_classes=NUM_CLASSES):
    # Mirror torch.nn.Linear default init bounds (uniform +/- 1/sqrt(fan_in)),
    # then store the weight pre-transposed as (K, N) and bias as (1, N) so no
    # per-call transpose / reshape brackets the Pallas call.
    kw, kb = jax.random.split(key)
    bound = 1.0 / math.sqrt(dim)
    w = jax.random.uniform(kw, (num_classes, dim), jnp.float32,
                           minval=-bound, maxval=bound)
    b = jax.random.uniform(kb, (num_classes,), jnp.float32,
                           minval=-bound, maxval=bound)
    return jnp.transpose(w), b.reshape(1, num_classes)


# --------------------------- main --------------------------------------------

if __name__ == "__main__":
    key = jax.random.PRNGKey(0)
    key, kz, kp, kz2 = jax.random.split(key, 4)

    params = init_params(kp)
    w_t, b2 = params

    fwd = jax.jit(densenet_classifier_forward)

    # ---- Small-batch path (single block, no grid tiling) ----
    N_BATCH = 2
    z = jax.random.normal(kz, (N_BATCH, DIM), jnp.float32)
    out = fwd(z, params)
    jax.block_until_ready(out)

    ref = jnp.dot(z, w_t, precision=jax.lax.Precision.HIGHEST) + b2
    assert out.shape == (N_BATCH, NUM_CLASSES)
    assert bool(jnp.isfinite(out).all())
    assert bool(jnp.allclose(out, ref, atol=1e-2, rtol=1e-2))

    # ---- Ragged tiled path (M not a multiple of tm; masked writeback) ----
    M_BIG = 2600
    z_big = jax.random.normal(kz2, (M_BIG, DIM), jnp.float32)
    out_big = fwd(z_big, params)
    jax.block_until_ready(out_big)

    ref_big = jnp.dot(z_big, w_t, precision=jax.lax.Precision.HIGHEST) + b2
    assert out_big.shape == (M_BIG, NUM_CLASSES)
    assert bool(jnp.isfinite(out_big).all())
    assert bool(jnp.allclose(out_big, ref_big, atol=1e-2, rtol=1e-2))

    print("KERNEL_OK")
</pallas_src>

<mosaic_0001>
module attributes {stable_mosaic.version = 11 : i64} {
  func.func @_linear_bias_kernel(%arg0: i32, %arg1: memref<2x456xf32, #tpu.memory_space<vmem>>, %arg2: memref<456x10xf32, #tpu.memory_space<vmem>>, %arg3: memref<1x10xf32, #tpu.memory_space<vmem>>, %arg4: memref<2x10xf32, #tpu.memory_space<vmem>>) attributes {dimension_semantics = [#tpu.dimension_semantics<parallel>], iteration_bounds = array<i64: 1>, scalar_prefetch = 0 : i64, scratch_operands = 0 : i64, tpu.core_type = #tpu.core_type<tc>, window_params = [{transform_indices = @transform_0, window_bounds = array<i64: 2, 456>}, {pipeline_mode = #tpu.pipeline_mode<synchronous>, transform_indices = @transform_1, window_bounds = array<i64: 456, 10>}, {pipeline_mode = #tpu.pipeline_mode<synchronous>, transform_indices = @transform_2, window_bounds = array<i64: 1, 10>}, {transform_indices = @transform_3, window_bounds = array<i64: 2, 10>}]} {
    %c0 = arith.constant 0 : index
    %c0_0 = arith.constant 0 : index
    %0 = vector.load %arg1[%c0, %c0_0] : memref<2x456xf32, #tpu.memory_space<vmem>>, vector<2x456xf32>
    %c0_1 = arith.constant 0 : index
    %c0_2 = arith.constant 0 : index
    %1 = vector.load %arg2[%c0_1, %c0_2] : memref<456x10xf32, #tpu.memory_space<vmem>>, vector<456x10xf32>
    %cst = arith.constant dense<0.000000e+00> : vector<2x10xf32>
    %2 = tpu.matmul %0, %1, %cst {dimension_numbers = #tpu.dot_dimension_numbers<[1], [0], [0], [1], [0, 0, 1, 1], [], []>} : vector<2x456xf32>, vector<456x10xf32>, vector<2x10xf32> -> vector<2x10xf32>
    %c0_3 = arith.constant 0 : index
    %c0_4 = arith.constant 0 : index
    %3 = vector.load %arg3[%c0_3, %c0_4] : memref<1x10xf32, #tpu.memory_space<vmem>>, vector<1x10xf32>
    %4 = vector.broadcast %3 : vector<1x10xf32> to vector<2x10xf32>
    %5 = arith.addf %2, %4 : vector<2x10xf32>
    %c0_5 = arith.constant 0 : index
    %c0_6 = arith.constant 0 : index
    %6 = vector.load %arg4[%c0_5, %c0_6] : memref<2x10xf32, #tpu.memory_space<vmem>>, vector<2x10xf32>
    tpu.vector_store %arg4[%c0_5, %c0_6], %5 {strides = array<i32>} : memref<2x10xf32, #tpu.memory_space<vmem>>, vector<2x10xf32>,
    return
  }
  func.func @transform_0(%arg0: i32) -> (i32, i32) {
    %c0_i32 = arith.constant 0 : i32
    %c0_i32_0 = arith.constant 0 : i32
    return %arg0, %c0_i32 : i32, i32
  }
  func.func @transform_1(%arg0: i32) -> (i32, i32) {
    %c0_i32 = arith.constant 0 : i32
    %c0_i32_0 = arith.constant 0 : i32
    %c0_i32_1 = arith.constant 0 : i32
    return %c0_i32, %c0_i32_0 : i32, i32
  }
  func.func @transform_2(%arg0: i32) -> (i32, i32) {
    %c0_i32 = arith.constant 0 : i32
    %c0_i32_0 = arith.constant 0 : i32
    %c0_i32_1 = arith.constant 0 : i32
    return %c0_i32, %c0_i32_0 : i32, i32
  }
  func.func @transform_3(%arg0: i32) -> (i32, i32) {
    %c0_i32 = arith.constant 0 : i32
    %c0_i32_0 = arith.constant 0 : i32
    return %arg0, %c0_i32 : i32, i32
  }
}

</mosaic_0001>

<llo_original>
// kernel: densenet_classifier_forward.1
$region0: #{densenet_classifier_forward.1}
  #allocation0 [shape = 'u32[]', space=smem, size = 0x4, offset = 0x4, fixed_abs, tag = 'smem constant byte address 0x4 - core index']
  #allocation1 [shape = 'u32[144,128]{1,0:T(1,128)}', space=vmem, size = 0x12000, scoped, tag = 'internal scratch']
  %s0 = inlined_call_operand.vmem [shape: f32[2,456], index: 0, kind: input, shape index: {}]
  %s1 = inlined_call_operand.vmem [shape: f32[456,10], index: 1, kind: input, shape index: {}]
  %s2 = inlined_call_operand.vmem [shape: f32[1,10], index: 2, kind: input, shape index: {}]
  %s3 = inlined_call_operand.hbm [shape: f32[2,10], index: 3, kind: output, shape index: {}]
  %s4 = sld [smem:[#allocation0]]
  $region22: #{densenet_classifier_forward.1} parent=0
    _
  %s6 = ssub.s32 1, %s4
  %s7 = scalar_select 0, %s6, %s4
  $region1: #{densenet_classifier_forward.1} parent=0
    #allocation2 [shape = 'u8[1024]{0}', space=vmem, size = 0x400, scoped, tag = 'output window, operand 0, single buffered']
    #allocation3 [shape = 's32[1]{0}', space=sflag, size = 0x4, scoped, tag = 'scoped memory for densenet_classifier_forward.1']
    %8 = vsyncpa [#allocation3], 0
    // Predicated region
    $region2: #{densenet_classifier_forward.1} parent=1 // pred_check
      _
    $region3: #{densenet_classifier_forward.1} parent=1 // pred_check_branch
      %10 = sbr.rel (0) target = $region5
    $region4: #{densenet_classifier_forward.1} parent=1 // pred_region
      _
    $region5: #{densenet_classifier_forward.1} parent=1 // pred_fallthru
      _
    // Predicated region
    $region6: #{densenet_classifier_forward.1} parent=1 // pred_check
      _
    $region7: #{densenet_classifier_forward.1} parent=1 // pred_check_branch
      %12 = sbr.rel (0) target = $region9
    $region8: #{densenet_classifier_forward.1} parent=1 // pred_region
      _
    $region9: #{densenet_classifier_forward.1} parent=1 // pred_fallthru
      _
    // Predicated region
    $region10: #{densenet_classifier_forward.1} parent=1 // pred_check
      _
    $region11: #{densenet_classifier_forward.1} parent=1 // pred_check_branch
      %14 = sbr.rel (0) target = $region13
    $region12: #{densenet_classifier_forward.1} parent=1 // pred_region
      _
    $region13: #{densenet_classifier_forward.1} parent=1 // pred_fallthru
      _
    %v15 = vld [vmem:[%s0] sm:$0xff]
    %v16 = vld [vmem:[%s1] sm:$0xff]
    %v17 = vld [vmem:[%s1 + $0x8] sm:$0xff]
    %v18 = vld [vmem:[%s1 + $0x10] sm:$0xff]
    %v19 = vld [vmem:[%s1 + $0x18] sm:$0xff]
    %v20 = vld [vmem:[%s1 + $0x20] sm:$0xff]
    %v21 = vld [vmem:[%s1 + $0x28] sm:$0xff]
    %v22 = vld [vmem:[%s1 + $0x30] sm:$0xff]
    %v23 = vld [vmem:[%s1 + $0x38] sm:$0xff]
    %v24 = vld [vmem:[%s1 + $0x40] sm:$0xff]
    %v25 = vld [vmem:[%s1 + $0x48] sm:$0xff]
    %v26 = vld [vmem:[%s1 + $0x50] sm:$0xff]
    %v27 = vld [vmem:[%s1 + $0x58] sm:$0xff]
    %v28 = vld [vmem:[%s1 + $0x60] sm:$0xff]
    %v29 = vld [vmem:[%s1 + $0x68] sm:$0xff]
    %v30 = vld [vmem:[%s1 + $0x70] sm:$0xff]
    %v31 = vld [vmem:[%s1 + $0x78] sm:$0xff]
    %v32 = vld [vmem:[%s1 + $0x80] sm:$0xff]
    %v33 = vld [vmem:[%s1 + $0x88] sm:$0xff]
    %v34 = vld [vmem:[%s1 + $0x90] sm:$0xff]
    %v35 = vld [vmem:[%s1 + $0x98] sm:$0xff]
    %v36 = vld [vmem:[%s1 + $0xa0] sm:$0xff]
    %v37 = vld [vmem:[%s1 + $0xa8] sm:$0xff]
    %v38 = vld [vmem:[%s1 + $0xb0] sm:$0xff]
    %v39 = vld [vmem:[%s1 + $0xb8] sm:$0xff]
    %v40 = vld [vmem:[%s1 + $0xc0] sm:$0xff]
    %v41 = vld [vmem:[%s1 + $0xc8] sm:$0xff]
    %v42 = vld [vmem:[%s1 + $0xd0] sm:$0xff]
    %v43 = vld [vmem:[%s1 + $0xd8] sm:$0xff]
    %v44 = vld [vmem:[%s1 + $0xe0] sm:$0xff]
    %v45 = vld [vmem:[%s1 + $0xe8] sm:$0xff]
    %v46 = vld [vmem:[%s1 + $0xf0] sm:$0xff]
    %v47 = vld [vmem:[%s1 + $0xf8] sm:$0xff]
    %v48 = vld [vmem:[%s1 + $0x100] sm:$0xff]
    %v49 = vld [vmem:[%s1 + $0x108] sm:$0xff]
    %v50 = vld [vmem:[%s1 + $0x110] sm:$0xff]
    %v51 = vld [vmem:[%s1 + $0x118] sm:$0xff]
    %v52 = vld [vmem:[%s1 + $0x120] sm:$0xff]
    %v53 = vld [vmem:[%s1 + $0x128] sm:$0xff]
    %v54 = vld [vmem:[%s1 + $0x130] sm:$0xff]
    %v55 = vld [vmem:[%s1 + $0x138] sm:$0xff]
    %v56 = vld [vmem:[%s1 + $0x140] sm:$0xff]
    %v57 = vld [vmem:[%s1 + $0x148] sm:$0xff]
    %v58 = vld [vmem:[%s1 + $0x150] sm:$0xff]
    %v59 = vld [vmem:[%s1 + $0x158] sm:$0xff]
    %v60 = vld [vmem:[%s1 + $0x160] sm:$0xff]
    %v61 = vld [vmem:[%s1 + $0x168] sm:$0xff]
    %v62 = vld [vmem:[%s1 + $0x170] sm:$0xff]
    %v63 = vld [vmem:[%s1 + $0x178] sm:$0xff]
    %v64 = vld [vmem:[%s1 + $0x180] sm:$0xff]
    %v65 = vld [vmem:[%s1 + $0x188] sm:$0xff]
    %v66 = vld [vmem:[%s1 + $0x190] sm:$0xff]
    %v67 = vld [vmem:[%s1 + $0x198] sm:$0xff]
    %v68 = vld [vmem:[%s1 + $0x1a0] sm:$0xff]
    %v69 = vld [vmem:[%s1 + $0x1a8] sm:$0xff]
    %v70 = vld [vmem:[%s1 + $0x1b0] sm:$0xff]
    %v71 = vld [vmem:[%s1 + $0x1b8] sm:$0xff]
    %v72 = vld [vmem:[%s1 + $0x1c0] sm:$0xff]
    %v73 = vld [vmem:[%s2] sm:$0x1]
    %v75 = vlaneseq
    %v76 = vshrl.u32 %v75, 7
    %v77 = vsub.s32 0, %v76
    %v78 = vrot.slane %v73, %v77
    %v81 = vcombine.high %v15, %v15
    %v83 = vunpack.c.l.s4 1983009808
    %v84 = vunpack.c.0.s8 %v83
    %v85 = vlaneseq
    %v86 = vshrl.u32 %v85, 7
    %v87 = vsub.s32 %v84, %v86
    %v88 = vrot.slane %v15, %v87
    %v90 = vunpack.c.l.s4 1983009808
    %v91 = vunpack.c.0.s8 %v90
    %v92 = vlaneseq
    %v93 = vshrl.u32 %v92, 7
    %v94 = vsub.s32 %v91, %v93
    %v95 = vrot.slane %v81, %v94
    %v96 = vcombine.high %v88, %v88
    %v97 = vcombine.high %v95, %v95
    %vm101 = vcmask 588800
    %v102 = vsel %vm101, %v97, 0
    %104 = vmatprep.subr.mxu0 0.0
    %105 = vmatpush1.msra.mxu0 %v31
    %106 = vmatprep.subr.mxu0 0.0
    %107 = vmatpush1.msra.mxu0 %v30
    %108 = vmatprep.subr.mxu0 0.0
    %109 = vmatpush1.msra.mxu0 %v29
    %110 = vmatprep.subr.mxu0 0.0
    %111 = vmatpush1.msra.mxu0 %v28
    %112 = vmatprep.subr.mxu0 0.0
    %113 = vmatpush1.msra.mxu0 %v27
    %114 = vmatprep.subr.mxu0 0.0
    %115 = vmatpush1.msra.mxu0 %v26
    %116 = vmatprep.subr.mxu0 0.0
    %117 = vmatpush1.msra.mxu0 %v25
    %118 = vmatprep.subr.mxu0 0.0
    %119 = vmatpush1.msra.mxu0 %v24
    %120 = vmatprep.subr.mxu0 0.0
    %121 = vmatpush1.msra.mxu0 %v23
    %122 = vmatprep.subr.mxu0 0.0
    %123 = vmatpush1.msra.mxu0 %v22
    %124 = vmatprep.subr.mxu0 0.0
    %125 = vmatpush1.msra.mxu0 %v21
    %126 = vmatprep.subr.mxu0 0.0
    %127 = vmatpush1.msra.mxu0 %v20
    %128 = vmatprep.subr.mxu0 0.0
    %129 = vmatpush1.msra.mxu0 %v19
    %130 = vmatprep.subr.mxu0 0.0
    %131 = vmatpush1.msra.mxu0 %v18
    %132 = vmatprep.subr.mxu0 0.0
    %133 = vmatpush1.msra.mxu0 %v17
    %134 = vmatprep.subr.mxu0 0.0
    %135 = vmatpush1.msra.mxu0 %v16
    %136 = vmatprep.subr.mxu0 0.0
    %137 = vmatpush2.msra.mxu0 %v47
    %138 = vmatprep.subr.mxu0 0.0
    %139 = vmatpush2.msra.mxu0 %v46
    %140 = vmatprep.subr.mxu0 0.0
    %141 = vmatpush2.msra.mxu0 %v45
    %142 = vmatprep.subr.mxu0 0.0
    %143 = vmatpush2.msra.mxu0 %v44
    %144 = vmatprep.subr.mxu0 0.0
    %145 = vmatpush2.msra.mxu0 %v43
    %146 = vmatprep.subr.mxu0 0.0
    %147 = vmatpush2.msra.mxu0 %v42
    %148 = vmatprep.subr.mxu0 0.0
    %149 = vmatpush2.msra.mxu0 %v41
    %150 = vmatprep.subr.mxu0 0.0
    %151 = vmatpush2.msra.mxu0 %v40
    %152 = vmatprep.subr.mxu0 0.0
    %153 = vmatpush2.msra.mxu0 %v39
    %154 = vmatprep.subr.mxu0 0.0
    %155 = vmatpush2.msra.mxu0 %v38
    %156 = vmatprep.subr.mxu0 0.0
    %157 = vmatpush2.msra.mxu0 %v37
    %158 = vmatprep.subr.mxu0 0.0
    %159 = vmatpush2.msra.mxu0 %v36
    %160 = vmatprep.subr.mxu0 0.0
    %161 = vmatpush2.msra.mxu0 %v35
    %162 = vmatprep.subr.mxu0 0.0
    %163 = vmatpush2.msra.mxu0 %v34
    %164 = vmatprep.subr.mxu0 0.0
    %165 = vmatpush2.msra.mxu0 %v33
    %166 = vmatprep.subr.mxu0 0.0
    %167 = vmatpush2.msra.mxu0 %v32
    %168 = vmatprep.mubr.f32.mxu0 %v96
    %169 = vmatmul.mubr.f32.gmra.mxu0 %v88
    %v170 = vpop.f32.mrf.mxu0
    %v171 = vadd.f32 %v78, %v170
    %v172 = vpop.f32.mrf.mxu0
    %173 = vdwg.mxu0
    %174 = vmatprep.subr.mxu0 0.0
    %175 = vmatpush1.msra.mxu0 %v63
    %176 = vmatprep.subr.mxu0 0.0
    %177 = vmatpush1.msra.mxu0 %v62
    %178 = vmatprep.subr.mxu0 0.0
    %179 = vmatpush1.msra.mxu0 %v61
    %180 = vmatprep.subr.mxu0 0.0
    %181 = vmatpush1.msra.mxu0 %v60
    %182 = vmatprep.subr.mxu0 0.0
    %183 = vmatpush1.msra.mxu0 %v59
    %184 = vmatprep.subr.mxu0 0.0
    %185 = vmatpush1.msra.mxu0 %v58
    %186 = vmatprep.subr.mxu0 0.0
    %187 = vmatpush1.msra.mxu0 %v57
    %188 = vmatprep.subr.mxu0 0.0
    %189 = vmatpush1.msra.mxu0 %v56
    %190 = vmatprep.subr.mxu0 0.0
    %191 = vmatpush1.msra.mxu0 %v55
    %192 = vmatprep.subr.mxu0 0.0
    %193 = vmatpush1.msra.mxu0 %v54
    %194 = vmatprep.subr.mxu0 0.0
    %195 = vmatpush1.msra.mxu0 %v53
    %196 = vmatprep.subr.mxu0 0.0
    %197 = vmatpush1.msra.mxu0 %v52
    %198 = vmatprep.subr.mxu0 0.0
    %199 = vmatpush1.msra.mxu0 %v51
    %200 = vmatprep.subr.mxu0 0.0
    %201 = vmatpush1.msra.mxu0 %v50
    %202 = vmatprep.subr.mxu0 0.0
    %203 = vmatpush1.msra.mxu0 %v49
    %204 = vmatprep.subr.mxu0 0.0
    %205 = vmatpush1.msra.mxu0 %v48
    %206 = vmatprep.subr.mxu0 0.0
    %207 = vmatpush2.msra.mxu0 0.0
    %208 = vmatprep.subr.mxu0 0.0
    %209 = vmatpush2.msra.mxu0 0.0
    %210 = vmatprep.subr.mxu0 0.0
    %211 = vmatpush2.msra.mxu0 0.0
    %212 = vmatprep.subr.mxu0 0.0
    %213 = vmatpush2.msra.mxu0 0.0
    %214 = vmatprep.subr.mxu0 0.0
    %215 = vmatpush2.msra.mxu0 0.0
    %216 = vmatprep.subr.mxu0 0.0
    %217 = vmatpush2.msra.mxu0 0.0
    %218 = vmatprep.subr.mxu0 0.0
    %219 = vmatpush2.msra.mxu0 0.0
    %220 = vmatprep.subr.mxu0 0.0
    %221 = vmatpush2.msra.mxu0 %v72
    %222 = vmatprep.subr.mxu0 0.0
    %223 = vmatpush2.msra.mxu0 %v71
    %224 = vmatprep.subr.mxu0 0.0
    %225 = vmatpush2.msra.mxu0 %v70
    %226 = vmatprep.subr.mxu0 0.0
    %227 = vmatpush2.msra.mxu0 %v69
    %228 = vmatprep.subr.mxu0 0.0
    %229 = vmatpush2.msra.mxu0 %v68
    %230 = vmatprep.subr.mxu0 0.0
    %231 = vmatpush2.msra.mxu0 %v67
    %232 = vmatprep.subr.mxu0 0.0
    %233 = vmatpush2.msra.mxu0 %v66
    %234 = vmatprep.subr.mxu0 0.0
    %235 = vmatpush2.msra.mxu0 %v65
    %236 = vmatprep.subr.mxu0 0.0
    %237 = vmatpush2.msra.mxu0 %v64
    %238 = vmatprep.mubr.f32.mxu0 %v102
    %239 = vmatmul.mubr.f32.gmra.mxu0 %v95
    %v240 = vpop.f32.mrf.mxu0
    %v241 = vadd.f32 %v171, %v240
    %v242 = vpop.f32.mrf.mxu0
    %243 = vdwg.mxu0
    %vm244 = vcmask 74752
    %245 = vst.msk [vmem:[#allocation2] sm:$0x3] %vm244, %v241
    // Predicated region
    $region14: #{densenet_classifier_forward.1} parent=1 // pred_check
      _
    $region15: #{densenet_classifier_forward.1} parent=1 // pred_check_branch
      %247 = sbr.rel (0) target = $region17
    $region16: #{densenet_classifier_forward.1} parent=1 // pred_region
      %s249 = ssub.s32 32, 32
      %250 = vsyncadd [#allocation3], %s249
      %s252 = sshll.u32 [#allocation2], 4
      %s253 = int_to_ptr.vmem [resolvable:$true] %s252
      %255 = dma.vmem_to_hbm [thread:$0]  %s253, 32, %s3, [#allocation3]
    $region17: #{densenet_classifier_forward.1} parent=1 // pred_fallthru
      _
    // Predicated region
    $region18: #{densenet_classifier_forward.1} parent=1 // pred_check
      _
    $region19: #{densenet_classifier_forward.1} parent=1 // pred_check_branch
      %257 = sbr.rel (0) target = $region21
    $region20: #{densenet_classifier_forward.1} parent=1 // pred_region
      %258 = dma.done [#allocation3], 32
    $region21: #{densenet_classifier_forward.1} parent=1 // pred_fallthru
      _
    %259 = vsyncpa [#allocation3], 1

</llo_original>
